<compile_context>
chip_gen: v7x
topology: tpu7x:2x2x1
jax: 0.10.0
libtpu: 0.0.40
codegen_flags: <defaults>
</compile_context>

<pallas_src>
import functools
import math

import jax
import jax.numpy as jnp
from jax.experimental import pallas as pl
from jax.experimental.pallas import tpu as pltpu


def _round_up(x, m):
    return ((x + m - 1) // m) * m


def _default_vmem_limit_bytes():
    # Leave ~25% headroom below physical VMEM; fall back to 48 MiB (safe on
    # v5e/v6e/v7x) if hardware introspection is unavailable.
    try:
        cap = pltpu.get_tpu_info().vmem_capacity_bytes
        return int(cap * 3 // 4)
    except Exception:
        return 48 * 1024 * 1024


def _expert_mlp_kernel(flags_ref, x_ref, wg_ref, wu_ref, wd_ref, aff_ref,
                       out_ref, acc_ref):
    ti = pl.program_id(0)          # token tile (parallel)
    e = pl.program_id(1)           # expert (reduction)
    ii = pl.program_id(2)          # intermediate-dim tile (reduction)
    n_e = pl.num_programs(1)
    n_i = pl.num_programs(2)

    @pl.when((e == 0) & (ii == 0))
    def _init():
        acc_ref[...] = jnp.zeros_like(acc_ref)

    # Skip experts that no token in this tile is routed to (their contribution
    # is exactly zero), using the scalar-prefetched routing flags in SMEM.
    @pl.when(flags_ref[ti, e] != 0)
    def _compute():
        x = x_ref[...]                                             # (tT, H) bf16
        gate = jnp.dot(x, wg_ref[...], preferred_element_type=jnp.float32)
        up = jnp.dot(x, wu_ref[...], preferred_element_type=jnp.float32)
        act = (jax.nn.silu(gate) * up).astype(jnp.bfloat16)        # (tT, tI)
        down = jnp.dot(act, wd_ref[...],
                       preferred_element_type=jnp.float32)         # (tT, H) partial over I

        # Extract this expert's masked-affinity column from the lane-dense
        # (tT, E_pad) slab.
        aff_block = aff_ref[...]                                   # (tT, E_pad) f32
        col = jax.lax.broadcasted_iota(jnp.int32, aff_block.shape, 1)
        aff = jnp.sum(jnp.where(col == e, aff_block, 0.0),
                      axis=-1, keepdims=True)                      # (tT, 1)

        acc_ref[...] += aff * down

    @pl.when((e == n_e - 1) & (ii == n_i - 1))
    def _store():
        out_ref[...] = acc_ref[...].astype(out_ref.dtype)


@functools.partial(jax.jit, static_argnames=("num_experts", "top_k",
                                             "token_tile", "inter_tile"))
def expert_mlps_forward(hidden_states, expert_affinities, expert_index,
                        w_gate, w_up, w_down, *, num_experts, top_k,
                        token_tile=None, inter_tile=None):
    """MoE ExpertMLPs forward.

    hidden_states:      (S, B, H)
    expert_affinities:  (T, E), T = S*B
    expert_index:       (T, top_k) int32
    w_gate, w_up:       (E, H, I)
    w_down:             (E, I, H)
    returns:            (S, B, H)
    """
    S, B, H = hidden_states.shape
    E = num_experts
    T = S * B
    I = w_gate.shape[-1]

    # --- tile sizes (static) -------------------------------------------------
    if token_tile is None:
        token_tile = min(256, _round_up(T, 16))
    token_tile = _round_up(int(token_tile), 16)     # bf16 sublane packing
    if inter_tile is None:
        inter_tile = 512 if I % 512 == 0 else I
    assert I % inter_tile == 0, "intermediate_size must be divisible by inter_tile"

    T_pad = _round_up(T, token_tile)
    n_t = T_pad // token_tile
    n_i = I // inter_tile
    E_pad = _round_up(E, 128)

    # --- wrapper-side glue (plain JAX) ---------------------------------------
    x = hidden_states.reshape(T, H)
    x_pad = jnp.zeros((T_pad, H), x.dtype).at[:T].set(x).astype(jnp.bfloat16)

    # mask[t, e] = 1 iff expert e is among expert_index[t, :]
    one_hot = jax.nn.one_hot(expert_index, E, dtype=jnp.float32)      # (T, k, E)
    mask = jnp.clip(jnp.sum(one_hot, axis=1), 0.0, 1.0)               # (T, E)
    aff_masked = expert_affinities.astype(jnp.float32) * mask         # (T, E)
    aff_pad = jnp.zeros((T_pad, E_pad), jnp.float32).at[:T, :E].set(aff_masked)

    # Per-(token tile, expert) "any token routed here" flags (scalar prefetch).
    mask_pad = jnp.zeros((T_pad, E), jnp.float32).at[:T].set(mask)
    flags = (mask_pad.reshape(n_t, token_tile, E).sum(axis=1) > 0).astype(jnp.int32)

    wg = w_gate.astype(jnp.bfloat16)       # (E, H, I)
    wu = w_up.astype(jnp.bfloat16)         # (E, H, I)
    wd = w_down.astype(jnp.bfloat16)       # (E, I, H)

    out_pad = pl.pallas_call(
        _expert_mlp_kernel,
        out_shape=jax.ShapeDtypeStruct((T_pad, H), hidden_states.dtype),
        grid_spec=pltpu.PrefetchScalarGridSpec(
            num_scalar_prefetch=1,
            grid=(n_t, E, n_i),
            in_specs=[
                pl.BlockSpec((token_tile, H),
                             lambda ti, e, ii, flags: (ti, 0)),            # x tile
                pl.BlockSpec((pl.Squeezed(), H, inter_tile),
                             lambda ti, e, ii, flags: (e, 0, ii)),         # gate proj slice
                pl.BlockSpec((pl.Squeezed(), H, inter_tile),
                             lambda ti, e, ii, flags: (e, 0, ii)),         # up proj slice
                pl.BlockSpec((pl.Squeezed(), inter_tile, H),
                             lambda ti, e, ii, flags: (e, ii, 0)),         # down proj slice
                pl.BlockSpec((token_tile, E_pad),
                             lambda ti, e, ii, flags: (ti, 0)),            # masked affinities
            ],
            out_specs=pl.BlockSpec((token_tile, H),
                                   lambda ti, e, ii, flags: (ti, 0)),
            scratch_shapes=[pltpu.VMEM((token_tile, H), jnp.float32)],
        ),
        compiler_params=pltpu.CompilerParams(
            dimension_semantics=("parallel", "arbitrary", "arbitrary"),
            vmem_limit_bytes=_default_vmem_limit_bytes(),
        ),
    )(flags, x_pad, wg, wu, wd, aff_pad)

    return out_pad[:T].reshape(S, B, H)


def _reference_forward(hidden_states, expert_affinities, expert_index,
                       w_gate, w_up, w_down, num_experts):
    """Pure-JAX reference mirroring the kernel's bf16 casts (f32 math)."""
    S, B, H = hidden_states.shape
    T = S * B
    x = hidden_states.reshape(T, H).astype(jnp.bfloat16).astype(jnp.float32)
    wg = w_gate.astype(jnp.bfloat16).astype(jnp.float32)
    wu = w_up.astype(jnp.bfloat16).astype(jnp.float32)
    wd = w_down.astype(jnp.bfloat16).astype(jnp.float32)
    one_hot = jax.nn.one_hot(expert_index, num_experts, dtype=jnp.float32)
    mask = jnp.clip(jnp.sum(one_hot, axis=1), 0.0, 1.0)
    aff = expert_affinities.astype(jnp.float32) * mask
    out = jnp.zeros((T, H), jnp.float32)
    for e in range(num_experts):
        gate = x @ wg[e]
        up = x @ wu[e]
        act = (jax.nn.silu(gate) * up).astype(jnp.bfloat16).astype(jnp.float32)
        y = act @ wd[e]
        out = out + aff[:, e:e + 1] * y
    return out.reshape(S, B, H).astype(hidden_states.dtype)


if __name__ == "__main__":
    # Small config consistent with ExpertMLPsBase.__init__ (lane-aligned dims).
    num_experts = 8
    top_k = 2
    hidden_size = 128
    intermediate_size = 256
    S, B = 16, 4
    T = S * B

    key = jax.random.PRNGKey(0)
    k_h, k_a, k_i, k_wg, k_wu, k_wd = jax.random.split(key, 6)

    hidden_states = jax.random.normal(k_h, (S, B, hidden_size), dtype=jnp.float32)

    # Normalized expert affinities and top_k expert indices.
    logits = jax.random.normal(k_a, (T, num_experts), dtype=jnp.float32)
    expert_affinities = jax.nn.softmax(logits, axis=-1)
    expert_index = jax.random.randint(k_i, (T, top_k), 0, num_experts, dtype=jnp.int32)

    # Deterministic weight init (init_method ~ scaled normal).
    scale_in = 1.0 / math.sqrt(hidden_size)
    scale_out = 1.0 / math.sqrt(intermediate_size)
    w_gate = jax.random.normal(k_wg, (num_experts, hidden_size, intermediate_size),
                               dtype=jnp.float32) * scale_in
    w_up = jax.random.normal(k_wu, (num_experts, hidden_size, intermediate_size),
                             dtype=jnp.float32) * scale_in
    w_down = jax.random.normal(k_wd, (num_experts, intermediate_size, hidden_size),
                               dtype=jnp.float32) * scale_out

    out = expert_mlps_forward(
        hidden_states, expert_affinities, expert_index,
        w_gate, w_up, w_down,
        num_experts=num_experts, top_k=top_k,
        token_tile=32, inter_tile=128,   # exercise token- and I-tiling at demo shapes
    )
    out = jax.block_until_ready(out)

    ref = _reference_forward(hidden_states, expert_affinities, expert_index,
                             w_gate, w_up, w_down, num_experts)
    assert out.shape == hidden_states.shape
    assert jnp.allclose(out, ref, atol=2e-2, rtol=2e-2), "Pallas output mismatch vs reference"

    print("KERNEL_OK")
</pallas_src>

<mosaic_0001>
module attributes {stable_mosaic.version = 11 : i64} {
  func.func @_expert_mlp_kernel(%arg0: i32, %arg1: i32, %arg2: i32, %arg3: memref<2x8xi32, #tpu.memory_space<smem>>, %arg4: memref<32x128xbf16, #tpu.memory_space<vmem>>, %arg5: memref<1x128x128xbf16, #tpu.memory_space<vmem>>, %arg6: memref<1x128x128xbf16, #tpu.memory_space<vmem>>, %arg7: memref<1x128x128xbf16, #tpu.memory_space<vmem>>, %arg8: memref<32x128xf32, #tpu.memory_space<vmem>>, %arg9: memref<32x128xf32, #tpu.memory_space<vmem>>, %arg10: memref<32x128xf32, #tpu.memory_space<vmem>>) attributes {dimension_semantics = [#tpu.dimension_semantics<parallel>, #tpu.dimension_semantics<arbitrary>, #tpu.dimension_semantics<arbitrary>], iteration_bounds = array<i64: 2, 8, 2>, scalar_prefetch = 1 : i64, scratch_operands = 1 : i64, tpu.core_type = #tpu.core_type<tc>, window_params = [{transform_indices = @transform_0, window_bounds = array<i64: 32, 128>}, {transform_indices = @transform_1, window_bounds = array<i64: 1, 128, 128>}, {transform_indices = @transform_2, window_bounds = array<i64: 1, 128, 128>}, {transform_indices = @transform_3, window_bounds = array<i64: 1, 128, 128>}, {transform_indices = @transform_4, window_bounds = array<i64: 32, 128>}, {transform_indices = @transform_5, window_bounds = array<i64: 32, 128>}]} {
    %c0_i32 = arith.constant 0 : i32
    %0 = arith.cmpi eq, %arg1, %c0_i32 : i32
    %c0_i32_0 = arith.constant 0 : i32
    %1 = arith.cmpi eq, %arg2, %c0_i32_0 : i32
    %2 = arith.andi %0, %1 : i1
    %3 = arith.extui %2 : i1 to i32
    %c0_i32_1 = arith.constant 0 : i32
    %4 = arith.cmpi ne, %3, %c0_i32_1 : i32
    scf.if %4 {
      %cst = arith.constant 0.000000e+00 : f32
      %16 = vector.broadcast %cst : f32 to vector<32x128xf32>
      %c0 = arith.constant 0 : index
      %c0_5 = arith.constant 0 : index
      %17 = vector.load %arg10[%c0, %c0_5] : memref<32x128xf32, #tpu.memory_space<vmem>>, vector<32x128xf32>
      tpu.vector_store %arg10[%c0, %c0_5], %16 {strides = array<i32>} : memref<32x128xf32, #tpu.memory_space<vmem>>, vector<32x128xf32>,
    } else {
    }
    %5 = arith.index_cast %arg0 : i32 to index
    %6 = arith.index_cast %arg1 : i32 to index
    %7 = memref.load %arg3[%5, %6] : memref<2x8xi32, #tpu.memory_space<smem>>
    %c0_i32_2 = arith.constant 0 : i32
    %8 = arith.cmpi ne, %7, %c0_i32_2 : i32
    %9 = arith.extui %8 : i1 to i32
    %c0_i32_3 = arith.constant 0 : i32
    %10 = arith.cmpi ne, %9, %c0_i32_3 : i32
    scf.if %10 {
      %c0 = arith.constant 0 : index
      %c0_5 = arith.constant 0 : index
      %16 = vector.load %arg4[%c0, %c0_5] : memref<32x128xbf16, #tpu.memory_space<vmem>>, vector<32x128xbf16>
      %c0_6 = arith.constant 0 : index
      %c0_7 = arith.constant 0 : index
      %c0_8 = arith.constant 0 : index
      %17 = vector.load %arg5[%c0_6, %c0_7, %c0_8] : memref<1x128x128xbf16, #tpu.memory_space<vmem>>, vector<1x128x128xbf16>
      %18 = vector.shape_cast %17 : vector<1x128x128xbf16> to vector<128x128xbf16>
      %cst = arith.constant dense<0.000000e+00> : vector<32x128xf32>
      %19 = tpu.matmul %16, %18, %cst {dimension_numbers = #tpu.dot_dimension_numbers<[1], [0], [0], [1], [0, 0, 1, 1], [], []>} : vector<32x128xbf16>, vector<128x128xbf16>, vector<32x128xf32> -> vector<32x128xf32>
      %c0_9 = arith.constant 0 : index
      %c0_10 = arith.constant 0 : index
      %c0_11 = arith.constant 0 : index
      %20 = vector.load %arg6[%c0_9, %c0_10, %c0_11] : memref<1x128x128xbf16, #tpu.memory_space<vmem>>, vector<1x128x128xbf16>
      %21 = vector.shape_cast %20 : vector<1x128x128xbf16> to vector<128x128xbf16>
      %cst_12 = arith.constant dense<0.000000e+00> : vector<32x128xf32>
      %22 = tpu.matmul %16, %21, %cst_12 {dimension_numbers = #tpu.dot_dimension_numbers<[1], [0], [0], [1], [0, 0, 1, 1], [], []>} : vector<32x128xbf16>, vector<128x128xbf16>, vector<32x128xf32> -> vector<32x128xf32>
      %23 = arith.negf %19 : vector<32x128xf32>
      %24 = math.exp %23 : vector<32x128xf32>
      %cst_13 = arith.constant 1.000000e+00 : f32
      %25 = vector.broadcast %cst_13 : f32 to vector<32x128xf32>
      %26 = arith.addf %25, %24 : vector<32x128xf32>
      %27 = arith.divf %25, %26 : vector<32x128xf32>
      %28 = arith.mulf %19, %27 : vector<32x128xf32>
      %29 = arith.mulf %28, %22 : vector<32x128xf32>
      %30 = arith.truncf %29 : vector<32x128xf32> to vector<32x128xbf16>
      %c0_14 = arith.constant 0 : index
      %c0_15 = arith.constant 0 : index
      %c0_16 = arith.constant 0 : index
      %31 = vector.load %arg7[%c0_14, %c0_15, %c0_16] : memref<1x128x128xbf16, #tpu.memory_space<vmem>>, vector<1x128x128xbf16>
      %32 = vector.shape_cast %31 : vector<1x128x128xbf16> to vector<128x128xbf16>
      %cst_17 = arith.constant dense<0.000000e+00> : vector<32x128xf32>
      %33 = tpu.matmul %30, %32, %cst_17 {dimension_numbers = #tpu.dot_dimension_numbers<[1], [0], [0], [1], [0, 0, 1, 1], [], []>} : vector<32x128xbf16>, vector<128x128xbf16>, vector<32x128xf32> -> vector<32x128xf32>
      %c0_18 = arith.constant 0 : index
      %c0_19 = arith.constant 0 : index
      %34 = vector.load %arg8[%c0_18, %c0_19] : memref<32x128xf32, #tpu.memory_space<vmem>>, vector<32x128xf32>
      %35 = tpu.iota {dimensions = array<i32: 1>} : vector<32x128xi32>
      %36 = vector.broadcast %arg1 : i32 to vector<32x128xi32>
      %37 = arith.cmpi eq, %35, %36 : vector<32x128xi32>
      %cst_20 = arith.constant 0.000000e+00 : f32
      %38 = vector.broadcast %cst_20 : f32 to vector<32x128xf32>
      %39 = arith.select %37, %34, %38 : vector<32x128xi1>, vector<32x128xf32>
      %cst_21 = arith.constant dense<0.000000e+00> : vector<32xf32>
      %40 = vector.multi_reduction <add>, %39, %cst_21 [1] : vector<32x128xf32> to vector<32xf32>
      %41 = vector.shape_cast %40 : vector<32xf32> to vector<32x1xf32>
      %c0_22 = arith.constant 0 : index
      %c0_23 = arith.constant 0 : index
      %42 = vector.load %arg10[%c0_22, %c0_23] : memref<32x128xf32, #tpu.memory_space<vmem>>, vector<32x128xf32>
      %43 = vector.broadcast %41 : vector<32x1xf32> to vector<32x128xf32>
      %44 = arith.mulf %43, %33 : vector<32x128xf32>
      %45 = arith.addf %42, %44 : vector<32x128xf32>
      %c0_24 = arith.constant 0 : index
      %c0_25 = arith.constant 0 : index
      %46 = vector.load %arg10[%c0_24, %c0_25] : memref<32x128xf32, #tpu.memory_space<vmem>>, vector<32x128xf32>
      tpu.vector_store %arg10[%c0_24, %c0_25], %45 {strides = array<i32>} : memref<32x128xf32, #tpu.memory_space<vmem>>, vector<32x128xf32>,
    } else {
    }
    %c7_i32 = arith.constant 7 : i32
    %11 = arith.cmpi eq, %arg1, %c7_i32 : i32
    %c1_i32 = arith.constant 1 : i32
    %12 = arith.cmpi eq, %arg2, %c1_i32 : i32
    %13 = arith.andi %11, %12 : i1
    %14 = arith.extui %13 : i1 to i32
    %c0_i32_4 = arith.constant 0 : i32
    %15 = arith.cmpi ne, %14, %c0_i32_4 : i32
    scf.if %15 {
      %c0 = arith.constant 0 : index
      %c0_5 = arith.constant 0 : index
      %16 = vector.load %arg10[%c0, %c0_5] : memref<32x128xf32, #tpu.memory_space<vmem>>, vector<32x128xf32>
      %c0_6 = arith.constant 0 : index
      %c0_7 = arith.constant 0 : index
      %17 = vector.load %arg9[%c0_6, %c0_7] : memref<32x128xf32, #tpu.memory_space<vmem>>, vector<32x128xf32>
      tpu.vector_store %arg9[%c0_6, %c0_7], %16 {strides = array<i32>} : memref<32x128xf32, #tpu.memory_space<vmem>>, vector<32x128xf32>,
    } else {
    }
    return
  }
  func.func @transform_0(%arg0: i32, %arg1: i32, %arg2: i32, %arg3: memref<2x8xi32, #tpu.memory_space<smem>>) -> (i32, i32) {
    %c0_i32 = arith.constant 0 : i32
    %c0_i32_0 = arith.constant 0 : i32
    return %arg0, %c0_i32 : i32, i32
  }
  func.func @transform_1(%arg0: i32, %arg1: i32, %arg2: i32, %arg3: memref<2x8xi32, #tpu.memory_space<smem>>) -> (i32, i32, i32) {
    %c0_i32 = arith.constant 0 : i32
    %c0_i32_0 = arith.constant 0 : i32
    return %arg1, %c0_i32, %arg2 : i32, i32, i32
  }
  func.func @transform_2(%arg0: i32, %arg1: i32, %arg2: i32, %arg3: memref<2x8xi32, #tpu.memory_space<smem>>) -> (i32, i32, i32) {
    %c0_i32 = arith.constant 0 : i32
    %c0_i32_0 = arith.constant 0 : i32
    return %arg1, %c0_i32, %arg2 : i32, i32, i32
  }
  func.func @transform_3(%arg0: i32, %arg1: i32, %arg2: i32, %arg3: memref<2x8xi32, #tpu.memory_space<smem>>) -> (i32, i32, i32) {
    %c0_i32 = arith.constant 0 : i32
    %c0_i32_0 = arith.constant 0 : i32
    return %arg1, %arg2, %c0_i32 : i32, i32, i32
  }
  func.func @transform_4(%arg0: i32, %arg1: i32, %arg2: i32, %arg3: memref<2x8xi32, #tpu.memory_space<smem>>) -> (i32, i32) {
    %c0_i32 = arith.constant 0 : i32
    %c0_i32_0 = arith.constant 0 : i32
    return %arg0, %c0_i32 : i32, i32
  }
  func.func @transform_5(%arg0: i32, %arg1: i32, %arg2: i32, %arg3: memref<2x8xi32, #tpu.memory_space<smem>>) -> (i32, i32) {
    %c0_i32 = arith.constant 0 : i32
    %c0_i32_0 = arith.constant 0 : i32
    return %arg0, %c0_i32 : i32, i32
  }
}

</mosaic_0001>

<llo_original>
// kernel: expert_mlps_forward.1
$region0: #{expert_mlps_forward.1}
  #allocation0 [shape = 'u32[]', space=smem, size = 0x4, offset = 0x4, fixed_abs, tag = 'smem constant byte address 0x4 - core index']
  #allocation1 [shape = 'u32[144,128]{1,0:T(1,128)}', space=vmem, size = 0x12000, scoped, tag = 'internal scratch']
  #allocation2 [shape = 'f32[32,128]{1,0:T(8,128)}', space=vmem, size = 0x4000, scoped, tag = 'scratch operand']
  #allocation3 [shape = 's32[1]{0}', space=sflag, size = 0x4, scoped, tag = 'scoped memory for expert_mlps_forward.1']
  #allocation4 [shape = 'u8[1024]{0}', space=smem, size = 0x400, scoped, tag = 'prefetched SMEM operand 0']
  %s0 = inlined_call_operand.vmem [shape: s32[2,8], index: 0, kind: input, shape index: {}]
  %s1 = inlined_call_operand.vmem [shape: bf16[64,128], index: 1, kind: input, shape index: {}]
  %s2 = inlined_call_operand.vmem [shape: bf16[8,128,256], index: 2, kind: input, shape index: {}]
  %s3 = inlined_call_operand.vmem [shape: bf16[8,128,256], index: 3, kind: input, shape index: {}]
  %s4 = inlined_call_operand.vmem [shape: bf16[8,256,128], index: 4, kind: input, shape index: {}]
  %s5 = inlined_call_operand.vmem [shape: f32[64,128], index: 5, kind: input, shape index: {}]
  %s6 = inlined_call_operand.hbm [shape: f32[64,128], index: 6, kind: output, shape index: {}]
  %s7 = sld [smem:[#allocation0]]
  $region147: #{expert_mlps_forward.1} parent=0
    _
  %s9 = ssub.s32 1, %s7
  %s10 = scalar_select 0, %s9, %s7
  %s11 = sshll.u32 %s0, 4
  %s12 = int_to_ptr.vmem [resolvable:$true] %s11
  %14 = dma.vmem_to_smem %s12, 32, [#allocation4], [#allocation3]
  %15 = dma.done [#allocation3], 32
  %16 = sfence
  $region1: #{expert_mlps_forward.1} parent=0
    #allocation5 [shape = 'u8[65536]{0}', space=vmem, size = 0x10000, scoped, tag = 'input window, operand 2']
    #allocation6 [shape = 'u8[65536]{0}', space=vmem, size = 0x10000, scoped, tag = 'input window, operand 3']
    #allocation7 [shape = 'u8[32768]{0}', space=vmem, size = 0x8000, scoped, tag = 'output window, operand 0']
    #allocation8 [shape = 's32[2]{0}', space=sflag, size = 0x8, scoped, tag = 'scoped memory for expert_mlps_forward.1']
    %17 = vsyncpa [#allocation8], 0
    %s18 = scalar_lea.sflag [#allocation8], 1
    %19 = vsyncpa %s18, 0
    loop: start=0, step=1, limit=34
    $region2: #{expert_mlps_forward.1} parent=1 // loop_pre_header
      _
    $region3: #{expert_mlps_forward.1} parent=1 // loop_header
      %s21 = sphi 0, %s25
      %p22 = scmp.ge.s32.totalorder %s21, 34
      %s28 = sphi 0, %s47
      %s29 = sphi 0, %s43
      %s30 = sphi 0, %s39
      %s31 = sphi 0, %s28
      %s32 = sphi 0, %s29
      %s33 = sphi 0, %s30
      %s34 = sphi 0, %s31
      %s35 = sphi 0, %s32
      %s36 = sphi 0, %s33
      %s50 = sphi 0, %s52
      %s53 = sphi 0, %s50
      %s54 = sphi 0, %s53
      %s70 = sphi 0, %s54
      %s78 = sphi 0, %s80
      %s81 = sphi 0, %s78
      %s82 = sphi 0, %s81
      %s98 = sphi 0, %s82
      %s106 = sphi 0, %s108
      %s109 = sphi 0, %s106
      %s110 = sphi 0, %s109
      %s126 = sphi 0, %s110
      %s134 = sphi 0, %s136
      %s137 = sphi 0, %s134
      %s138 = sphi 0, %s137
      %s154 = sphi 0, %s138
      %s160 = sphi 0, %s162
      %s163 = sphi 0, %s160
      %s164 = sphi 0, %s163
      %s180 = sphi 0, %s164
      %s186 = sphi 0, %s188
      %s189 = sphi 0, %s186
      %s190 = sphi 0, %s189
      %s206 = sphi 0, %s190
    $region4: #{expert_mlps_forward.1} parent=1 // loop_header_branch
      %24 = sbr.rel (%p22) target = $region8
    $region5: #{expert_mlps_forward.1} parent=1 // loop_body
      %s26 = ssub.s32 %s21, 1
      %s27 = ssub.s32 %s21, 2
      %s37 = sadd.s32 1, %s30
      %p38 = scmp.ge.s32.totalorder %s37, 2
      %s39 = scalar_select %p38, 0, %s37
      %s40 = sadd.s32 1, %s29
      %s41 = scalar_select %p38, %s40, %s29
      %p42 = scmp.ge.s32.totalorder %s41, 8
      %s43 = scalar_select %p42, 0, %s41
      %s44 = sadd.s32 1, %s28
      %s45 = scalar_select %p42, %s44, %s28
      %p46 = scmp.ge.s32.totalorder %s45, 2
      %s47 = scalar_select %p46, 0, %s45
      %s48 = ssub.s32 %s28, %s47
      %p49 = scmp.eq.s32.totalorder %s48, 0
      %s51 = sadd.s32 %s50, 1
      %s52 = scalar_select %p49, %s50, %s51
      %p55 = pneg %p49
      %p56 = scmp.eq.s32.totalorder %s21, 31
      %p57 = por %p55, %p56
      %p58 = scmp.ne.s32.totalorder %s50, %s53
      %p59 = scmp.eq.s32.totalorder %s21, 0
      %p60 = por %p58, %p59
      %p61 = scmp.ne.s32.totalorder %s50, %s53
      %p62 = scmp.eq.s32.totalorder %s26, 31
      %p63 = por %p61, %p62
      %p64 = scmp.ne.s32.totalorder %s53, %s54
      %p65 = scmp.eq.s32.totalorder %s26, 0
      %p66 = por %p64, %p65
      %p67 = scmp.ne.s32.totalorder %s53, %s54
      %p68 = scmp.eq.s32.totalorder %s27, 31
      %p69 = por %p67, %p68
      %p71 = scmp.ne.s32.totalorder %s54, %s70
      %p72 = scmp.eq.s32.totalorder %s27, 0
      %p73 = por %p71, %p72
      %s74 = ssub.s32 %s29, %s43
      %s75 = ssub.s32 %s30, %s39
      %s76 = sor.u32 %s74, %s75
      %p77 = scmp.eq.s32.totalorder %s76, 0
      %s79 = sadd.s32 %s78, 1
      %s80 = scalar_select %p77, %s78, %s79
      %p83 = pneg %p77
      %p84 = scmp.eq.s32.totalorder %s21, 31
      %p85 = por %p83, %p84
      %p86 = scmp.ne.s32.totalorder %s78, %s81
      %p87 = scmp.eq.s32.totalorder %s21, 0
      %p88 = por %p86, %p87
      %p89 = scmp.ne.s32.totalorder %s78, %s81
      %p90 = scmp.eq.s32.totalorder %s26, 31
      %p91 = por %p89, %p90
      %p92 = scmp.ne.s32.totalorder %s81, %s82
      %p93 = scmp.eq.s32.totalorder %s26, 0
      %p94 = por %p92, %p93
      %p95 = scmp.ne.s32.totalorder %s81, %s82
      %p96 = scmp.eq.s32.totalorder %s27, 31
      %p97 = por %p95, %p96
      %p99 = scmp.ne.s32.totalorder %s82, %s98
      %p100 = scmp.eq.s32.totalorder %s27, 0
      %p101 = por %p99, %p100
      %s102 = ssub.s32 %s29, %s43
      %s103 = ssub.s32 %s30, %s39
      %s104 = sor.u32 %s102, %s103
      %p105 = scmp.eq.s32.totalorder %s104, 0
      %s107 = sadd.s32 %s106, 1
      %s108 = scalar_select %p105, %s106, %s107
      %p111 = pneg %p105
      %p112 = scmp.eq.s32.totalorder %s21, 31
      %p113 = por %p111, %p112
      %p114 = scmp.ne.s32.totalorder %s106, %s109
      %p115 = scmp.eq.s32.totalorder %s21, 0
      %p116 = por %p114, %p115
      %p117 = scmp.ne.s32.totalorder %s106, %s109
      %p118 = scmp.eq.s32.totalorder %s26, 31
      %p119 = por %p117, %p118
      %p120 = scmp.ne.s32.totalorder %s109, %s110
      %p121 = scmp.eq.s32.totalorder %s26, 0
      %p122 = por %p120, %p121
      %p123 = scmp.ne.s32.totalorder %s109, %s110
      %p124 = scmp.eq.s32.totalorder %s27, 31
      %p125 = por %p123, %p124
      %p127 = scmp.ne.s32.totalorder %s110, %s126
      %p128 = scmp.eq.s32.totalorder %s27, 0
      %p129 = por %p127, %p128
      %s130 = ssub.s32 %s29, %s43
      %s131 = ssub.s32 %s30, %s39
      %s132 = sor.u32 %s130, %s131
      %p133 = scmp.eq.s32.totalorder %s132, 0
      %s135 = sadd.s32 %s134, 1
      %s136 = scalar_select %p133, %s134, %s135
      %p139 = pneg %p133
      %p140 = scmp.eq.s32.totalorder %s21, 31
      %p141 = por %p139, %p140
      %p142 = scmp.ne.s32.totalorder %s134, %s137
      %p143 = scmp.eq.s32.totalorder %s21, 0
      %p144 = por %p142, %p143
      %p145 = scmp.ne.s32.totalorder %s134, %s137
      %p146 = scmp.eq.s32.totalorder %s26, 31
      %p147 = por %p145, %p146
      %p148 = scmp.ne.s32.totalorder %s137, %s138
      %p149 = scmp.eq.s32.totalorder %s26, 0
      %p150 = por %p148, %p149
      %p151 = scmp.ne.s32.totalorder %s137, %s138
      %p152 = scmp.eq.s32.totalorder %s27, 31
      %p153 = por %p151, %p152
      %p155 = scmp.ne.s32.totalorder %s138, %s154
      %p156 = scmp.eq.s32.totalorder %s27, 0
      %p157 = por %p155, %p156
      %s158 = ssub.s32 %s28, %s47
      %p159 = scmp.eq.s32.totalorder %s158, 0
      %s161 = sadd.s32 %s160, 1
      %s162 = scalar_select %p159, %s160, %s161
      %p165 = pneg %p159
      %p166 = scmp.eq.s32.totalorder %s21, 31
      %p167 = por %p165, %p166
      %p168 = scmp.ne.s32.totalorder %s160, %s163
      %p169 = scmp.eq.s32.totalorder %s21, 0
      %p170 = por %p168, %p169
      %p171 = scmp.ne.s32.totalorder %s160, %s163
      %p172 = scmp.eq.s32.totalorder %s26, 31
      %p173 = por %p171, %p172
      %p174 = scmp.ne.s32.totalorder %s163, %s164
      %p175 = scmp.eq.s32.totalorder %s26, 0
      %p176 = por %p174, %p175
      %p177 = scmp.ne.s32.totalorder %s163, %s164
      %p178 = scmp.eq.s32.totalorder %s27, 31
      %p179 = por %p177, %p178
      %p181 = scmp.ne.s32.totalorder %s164, %s180
      %p182 = scmp.eq.s32.totalorder %s27, 0
      %p183 = por %p181, %p182
      %s184 = ssub.s32 %s28, %s47
      %p185 = scmp.eq.s32.totalorder %s184, 0
      %s187 = sadd.s32 %s186, 1
      %s188 = scalar_select %p185, %s186, %s187
      %p191 = pneg %p185
      %p192 = scmp.eq.s32.totalorder %s21, 31
      %p193 = por %p191, %p192
      %p194 = scmp.ne.s32.totalorder %s186, %s189
      %p195 = scmp.eq.s32.totalorder %s21, 0
      %p196 = por %p194, %p195
      %p197 = scmp.ne.s32.totalorder %s186, %s189
      %p198 = scmp.eq.s32.totalorder %s26, 31
      %p199 = por %p197, %p198
      %p200 = scmp.ne.s32.totalorder %s189, %s190
      %p201 = scmp.eq.s32.totalorder %s26, 0
      %p202 = por %p200, %p201
      %p203 = scmp.ne.s32.totalorder %s189, %s190
      %p204 = scmp.eq.s32.totalorder %s27, 31
      %p205 = por %p203, %p204
      %p207 = scmp.ne.s32.totalorder %s190, %s206
      %p208 = scmp.eq.s32.totalorder %s27, 0
      %p209 = por %p207, %p208
      %p210 = scmp.le.s32.totalorder 1, %s21
      %p211 = scmp.lt.s32.totalorder %s21, 33
      %p212 = pnand %p210, %p211
      %p213 = pneg %p212
      // Predicated region
      $region9: #{expert_mlps_forward.1} parent=5 // pred_check
        _
      $region10: #{expert_mlps_forward.1} parent=5 // pred_check_branch
        %215 = sbr.rel (%p212) target = $region12
      $region11: #{expert_mlps_forward.1} parent=5 // pred_region
        %s216 = ssub.s32 %s21, 1
      $region12: #{expert_mlps_forward.1} parent=5 // pred_fallthru
        _
      %p217 = scmp.lt.s32.totalorder %s21, 32
      // Predicated region
      $region13: #{expert_mlps_forward.1} parent=5 // pred_check
        %p218 = pneg %p217
      $region14: #{expert_mlps_forward.1} parent=5 // pred_check_branch
        %220 = sbr.rel (%p218) target = $region16
      $region15: #{expert_mlps_forward.1} parent=5 // pred_region
        // Predicated region
        $region17: #{expert_mlps_forward.1} parent=15 // pred_check
          %p221 = pneg %p60
        $region18: #{expert_mlps_forward.1} parent=15 // pred_check_branch
          %223 = sbr.rel (%p221) target = $region20
        $region19: #{expert_mlps_forward.1} parent=15 // pred_region
          %s224 = smul.u32 4, %s28
          %p225 = scmp.lt.s32.totalorder %s224, 7
          %s226 = scalar_select %p225, %s224, 7
          %s227 = smul.addr %s226, 4
          %s228 = scalar_lea.vmem %s1, %s227
          %s229 = smul.u32 4, %s28
        $region20: #{expert_mlps_forward.1} parent=15 // pred_fallthru
          _
        // Predicated region
        $region21: #{expert_mlps_forward.1} parent=15 // pred_check
          %p230 = pneg %p88
        $region22: #{expert_mlps_forward.1} parent=15 // pred_check_branch
          %232 = sbr.rel (%p230) target = $region24
        $region23: #{expert_mlps_forward.1} parent=15 // pred_region
          %s233 = sand.u32 %s78, 1
          %s234 = sand.u32 %s78, 1
          %s235 = smul.addr %s234, 64
          %s236 = scalar_lea.vmem [#allocation5], %s235
          %s237 = smul.addr %s29, 32
          %s238 = sadd.s32 %s30, %s237
          %s239 = smul.addr %s238, 4
          %s240 = scalar_lea.vmem %s2, %s239
          // Predicated region
          $region25: #{expert_mlps_forward.1} parent=23 // pred_check
            _
          $region26: #{expert_mlps_forward.1} parent=23 // pred_check_branch
            %242 = sbr.rel (0) target = $region28
          $region27: #{expert_mlps_forward.1} parent=23 // pred_region
            // Predicated region
            $region29: #{expert_mlps_forward.1} parent=27 // pred_check
              _
            $region30: #{expert_mlps_forward.1} parent=27 // pred_check_branch
              %244 = sbr.rel target = $region32
            $region31: #{expert_mlps_forward.1} parent=27 // pred_region
              // Predicated region
              $region44: #{expert_mlps_forward.1} parent=31 // pred_check
                _
              $region45: #{expert_mlps_forward.1} parent=31 // pred_check_branch
                %289 = sbr.rel (0) target = $region47
              $region46: #{expert_mlps_forward.1} parent=31 // pred_region
                loop: start=0, step=1, limit=1
                $region48: #{expert_mlps_forward.1} parent=46 // loop_pre_header
                  _
                $region49: #{expert_mlps_forward.1} parent=46 // loop_header
                  %s291 = sphi 0, %s295
                  %p292 = scmp.ge.s32.totalorder %s291, 1
                  %s296 = sphi %s240, %s240
                  %s297 = sphi %s236, %s236
                $region50: #{expert_mlps_forward.1} parent=46 // loop_header_branch
                  %294 = sbr.rel (%p292) target = $region54
                $region51: #{expert_mlps_forward.1} parent=46 // loop_body
                  _
                $region52: #{expert_mlps_forward.1} parent=46 // loop_footer
                  %s295 = sadd.s32 1, %s291
                $region53: #{expert_mlps_forward.1} parent=46 // loop_footer_branch
                  %290 = sbr.rel target = $region49
                $region54: #{expert_mlps_forward.1} parent=46 // loop_exit
                  _
                loop: start=0, step=1, limit=1
                $region55: #{expert_mlps_forward.1} parent=46 // loop_pre_header
                  _
                $region56: #{expert_mlps_forward.1} parent=46 // loop_header
                  %s300 = sphi 0, %s304
                  %p301 = scmp.ge.s32.totalorder %s300, 1
                  %s305 = sphi %s240, %s240
                  %s306 = sphi %s236, %s236
                $region57: #{expert_mlps_forward.1} parent=46 // loop_header_branch
                  %303 = sbr.rel (%p301) target = $region61
                $region58: #{expert_mlps_forward.1} parent=46 // loop_body
                  %v307 = vld [vmem:[%s305] sm:$0xf]
                  %308 = vst [vmem:[%s306] sm:$0xf] %v307
                  %v309 = vld [vmem:[%s305 + $0x8] sm:$0xf]
                  %310 = vst [vmem:[%s306 + $0x4] sm:$0xf] %v309
                  %v311 = vld [vmem:[%s305 + $0x10] sm:$0xf]
                  %312 = vst [vmem:[%s306 + $0x8] sm:$0xf] %v311
                  %v313 = vld [vmem:[%s305 + $0x18] sm:$0xf]
                  %314 = vst [vmem:[%s306 + $0xc] sm:$0xf] %v313
                  %v315 = vld [vmem:[%s305 + $0x20] sm:$0xf]
                  %316 = vst [vmem:[%s306 + $0x10] sm:$0xf] %v315
                  %v317 = vld [vmem:[%s305 + $0x28] sm:$0xf]
                  %318 = vst [vmem:[%s306 + $0x14] sm:$0xf] %v317
                  %v319 = vld [vmem:[%s305 + $0x30] sm:$0xf]
                  %320 = vst [vmem:[%s306 + $0x18] sm:$0xf] %v319
                  %v321 = vld [vmem:[%s305 + $0x38] sm:$0xf]
                  %322 = vst [vmem:[%s306 + $0x1c] sm:$0xf] %v321
                  %v323 = vld [vmem:[%s305 + $0x40] sm:$0xf]
                  %324 = vst [vmem:[%s306 + $0x20] sm:$0xf] %v323
                  %v325 = vld [vmem:[%s305 + $0x48] sm:$0xf]
                  %326 = vst [vmem:[%s306 + $0x24] sm:$0xf] %v325
                  %v327 = vld [vmem:[%s305 + $0x50] sm:$0xf]
                  %328 = vst [vmem:[%s306 + $0x28] sm:$0xf] %v327
                  %v329 = vld [vmem:[%s305 + $0x58] sm:$0xf]
                  %330 = vst [vmem:[%s306 + $0x2c] sm:$0xf] %v329
                  %v331 = vld [vmem:[%s305 + $0x60] sm:$0xf]
                  %332 = vst [vmem:[%s306 + $0x30] sm:$0xf] %v331
                  %v333 = vld [vmem:[%s305 + $0x68] sm:$0xf]
                  %334 = vst [vmem:[%s306 + $0x34] sm:$0xf] %v333
                  %v335 = vld [vmem:[%s305 + $0x70] sm:$0xf]
                  %336 = vst [vmem:[%s306 + $0x38] sm:$0xf] %v335
                  %v337 = vld [vmem:[%s305 + $0x78] sm:$0xf]
                  %338 = vst [vmem:[%s306 + $0x3c] sm:$0xf] %v337
                $region59: #{expert_mlps_forward.1} parent=46 // loop_footer
                  %s304 = sadd.s32 1, %s300
                $region60: #{expert_mlps_forward.1} parent=46 // loop_footer_branch
                  %299 = sbr.rel target = $region56
                $region61: #{expert_mlps_forward.1} parent=46 // loop_exit
                  _
              $region47: #{expert_mlps_forward.1} parent=31 // pred_fallthru
                _
            $region32: #{expert_mlps_forward.1} parent=27 // pred_fallthru
              _
            // Predicated region
            $region33: #{expert_mlps_forward.1} parent=27 // pred_check
              _
            $region34: #{expert_mlps_forward.1} parent=27 // pred_check_branch
              %246 = sbr.rel (0) target = $region36
            $region35: #{expert_mlps_forward.1} parent=27 // pred_region
              loop: start=0, step=1, limit=1
              $region37: #{expert_mlps_forward.1} parent=35 // loop_pre_header
                _
              $region38: #{expert_mlps_forward.1} parent=35 // loop_header
                %s249 = sphi 0, %s253
                %p250 = scmp.ge.s32.totalorder %s249, 1
                %s254 = sphi %s240, %s240
                %s255 = sphi %s236, %s236
              $region39: #{expert_mlps_forward.1} parent=35 // loop_header_branch
                %252 = sbr.rel (%p250) target = $region43
              $region40: #{expert_mlps_forward.1} parent=35 // loop_body
                %v256 = vld [vmem:[%s254] sm:$0xf]
                %257 = vst [vmem:[%s255] sm:$0xf] %v256
                %v258 = vld [vmem:[%s254 + $0x8] sm:$0xf]
                %259 = vst [vmem:[%s255 + $0x4] sm:$0xf] %v258
                %v260 = vld [vmem:[%s254 + $0x10] sm:$0xf]
                %261 = vst [vmem:[%s255 + $0x8] sm:$0xf] %v260
                %v262 = vld [vmem:[%s254 + $0x18] sm:$0xf]
                %263 = vst [vmem:[%s255 + $0xc] sm:$0xf] %v262
                %v264 = vld [vmem:[%s254 + $0x20] sm:$0xf]
                %265 = vst [vmem:[%s255 + $0x10] sm:$0xf] %v264
                %v266 = vld [vmem:[%s254 + $0x28] sm:$0xf]
                %267 = vst [vmem:[%s255 + $0x14] sm:$0xf] %v266
                %v268 = vld [vmem:[%s254 + $0x30] sm:$0xf]
                %269 = vst [vmem:[%s255 + $0x18] sm:$0xf] %v268
                %v270 = vld [vmem:[%s254 + $0x38] sm:$0xf]
                %271 = vst [vmem:[%s255 + $0x1c] sm:$0xf] %v270
                %v272 = vld [vmem:[%s254 + $0x40] sm:$0xf]
                %273 = vst [vmem:[%s255 + $0x20] sm:$0xf] %v272
                %v274 = vld [vmem:[%s254 + $0x48] sm:$0xf]
                %275 = vst [vmem:[%s255 + $0x24] sm:$0xf] %v274
                %v276 = vld [vmem:[%s254 + $0x50] sm:$0xf]
                %277 = vst [vmem:[%s255 + $0x28] sm:$0xf] %v276
                %v278 = vld [vmem:[%s254 + $0x58] sm:$0xf]
                %279 = vst [vmem:[%s255 + $0x2c] sm:$0xf] %v278
                %v280 = vld [vmem:[%s254 + $0x60] sm:$0xf]
                %281 = vst [vmem:[%s255 + $0x30] sm:$0xf] %v280
                %v282 = vld [vmem:[%s254 + $0x68] sm:$0xf]
                %283 = vst [vmem:[%s255 + $0x34] sm:$0xf] %v282
                %v284 = vld [vmem:[%s254 + $0x70] sm:$0xf]
                %285 = vst [vmem:[%s255 + $0x38] sm:$0xf] %v284
                %v286 = vld [vmem:[%s254 + $0x78] sm:$0xf]
                %287 = vst [vmem:[%s255 + $0x3c] sm:$0xf] %v286
              $region41: #{expert_mlps_forward.1} parent=35 // loop_footer
                %s253 = sadd.s32 1, %s249
              $region42: #{expert_mlps_forward.1} parent=35 // loop_footer_branch
                %248 = sbr.rel target = $region38
              $region43: #{expert_mlps_forward.1} parent=35 // loop_exit
                _
            $region36: #{expert_mlps_forward.1} parent=27 // pred_fallthru
              _
          $region28: #{expert_mlps_forward.1} parent=23 // pred_fallthru
            _
          %339 = vnop
        $region24: #{expert_mlps_forward.1} parent=15 // pred_fallthru
          _
        // Predicated region
        $region62: #{expert_mlps_forward.1} parent=15 // pred_check
          %p340 = pneg %p116
        $region63: #{expert_mlps_forward.1} parent=15 // pred_check_branch
          %342 = sbr.rel (%p340) target = $region65
        $region64: #{expert_mlps_forward.1} parent=15 // pred_region
          %s343 = sand.u32 %s106, 1
          %s344 = sand.u32 %s106, 1
          %s345 = smul.addr %s344, 64
          %s346 = scalar_lea.vmem [#allocation6], %s345
          %s347 = smul.addr %s29, 32
          %s348 = sadd.s32 %s30, %s347
          %s349 = smul.addr %s348, 4
          %s350 = scalar_lea.vmem %s3, %s349
          // Predicated region
          $region66: #{expert_mlps_forward.1} parent=64 // pred_check
            _
          $region67: #{expert_mlps_forward.1} parent=64 // pred_check_branch
            %352 = sbr.rel (0) target = $region69
          $region68: #{expert_mlps_forward.1} parent=64 // pred_region
            // Predicated region
            $region70: #{expert_mlps_forward.1} parent=68 // pred_check
              _
            $region71: #{expert_mlps_forward.1} parent=68 // pred_check_branch
              %354 = sbr.rel target = $region73
            $region72: #{expert_mlps_forward.1} parent=68 // pred_region
              // Predicated region
              $region85: #{expert_mlps_forward.1} parent=72 // pred_check
                _
              $region86: #{expert_mlps_forward.1} parent=72 // pred_check_branch
                %399 = sbr.rel (0) target = $region88
              $region87: #{expert_mlps_forward.1} parent=72 // pred_region
                loop: start=0, step=1, limit=1
                $region89: #{expert_mlps_forward.1} parent=87 // loop_pre_header
                  _
                $region90: #{expert_mlps_forward.1} parent=87 // loop_header
                  %s401 = sphi 0, %s405
                  %p402 = scmp.ge.s32.totalorder %s401, 1
                  %s406 = sphi %s350, %s350
                  %s407 = sphi %s346, %s346
                $region91: #{expert_mlps_forward.1} parent=87 // loop_header_branch
                  %404 = sbr.rel (%p402) target = $region95
                $region92: #{expert_mlps_forward.1} parent=87 // loop_body
                  _
                $region93: #{expert_mlps_forward.1} parent=87 // loop_footer
                  %s405 = sadd.s32 1, %s401
                $region94: #{expert_mlps_forward.1} parent=87 // loop_footer_branch
                  %400 = sbr.rel target = $region90
                $region95: #{expert_mlps_forward.1} parent=87 // loop_exit
                  _
                loop: start=0, step=1, limit=1
                $region96: #{expert_mlps_forward.1} parent=87 // loop_pre_header
                  _
                $region97: #{expert_mlps_forward.1} parent=87 // loop_header
                  %s410 = sphi 0, %s414
                  %p411 = scmp.ge.s32.totalorder %s410, 1
                  %s415 = sphi %s350, %s350
                  %s416 = sphi %s346, %s346
                $region98: #{expert_mlps_forward.1} parent=87 // loop_header_branch
                  %413 = sbr.rel (%p411) target = $region102
                $region99: #{expert_mlps_forward.1} parent=87 // loop_body
                  %v417 = vld [vmem:[%s415] sm:$0xf]
                  %418 = vst [vmem:[%s416] sm:$0xf] %v417
                  %v419 = vld [vmem:[%s415 + $0x8] sm:$0xf]
                  %420 = vst [vmem:[%s416 + $0x4] sm:$0xf] %v419
                  %v421 = vld [vmem:[%s415 + $0x10] sm:$0xf]
                  %422 = vst [vmem:[%s416 + $0x8] sm:$0xf] %v421
                  %v423 = vld [vmem:[%s415 + $0x18] sm:$0xf]
                  %424 = vst [vmem:[%s416 + $0xc] sm:$0xf] %v423
                  %v425 = vld [vmem:[%s415 + $0x20] sm:$0xf]
                  %426 = vst [vmem:[%s416 + $0x10] sm:$0xf] %v425
                  %v427 = vld [vmem:[%s415 + $0x28] sm:$0xf]
                  %428 = vst [vmem:[%s416 + $0x14] sm:$0xf] %v427
                  %v429 = vld [vmem:[%s415 + $0x30] sm:$0xf]
                  %430 = vst [vmem:[%s416 + $0x18] sm:$0xf] %v429
                  %v431 = vld [vmem:[%s415 + $0x38] sm:$0xf]
                  %432 = vst [vmem:[%s416 + $0x1c] sm:$0xf] %v431
                  %v433 = vld [vmem:[%s415 + $0x40] sm:$0xf]
                  %434 = vst [vmem:[%s416 + $0x20] sm:$0xf] %v433
                  %v435 = vld [vmem:[%s415 + $0x48] sm:$0xf]
                  %436 = vst [vmem:[%s416 + $0x24] sm:$0xf] %v435
                  %v437 = vld [vmem:[%s415 + $0x50] sm:$0xf]
                  %438 = vst [vmem:[%s416 + $0x28] sm:$0xf] %v437
                  %v439 = vld [vmem:[%s415 + $0x58] sm:$0xf]
                  %440 = vst [vmem:[%s416 + $0x2c] sm:$0xf] %v439
                  %v441 = vld [vmem:[%s415 + $0x60] sm:$0xf]
                  %442 = vst [vmem:[%s416 + $0x30] sm:$0xf] %v441
                  %v443 = vld [vmem:[%s415 + $0x68] sm:$0xf]
                  %444 = vst [vmem:[%s416 + $0x34] sm:$0xf] %v443
                  %v445 = vld [vmem:[%s415 + $0x70] sm:$0xf]
                  %446 = vst [vmem:[%s416 + $0x38] sm:$0xf] %v445
                  %v447 = vld [vmem:[%s415 + $0x78] sm:$0xf]
                  %448 = vst [vmem:[%s416 + $0x3c] sm:$0xf] %v447
                $region100: #{expert_mlps_forward.1} parent=87 // loop_footer
                  %s414 = sadd.s32 1, %s410
                $region101: #{expert_mlps_forward.1} parent=87 // loop_footer_branch
                  %409 = sbr.rel target = $region97
                $region102: #{expert_mlps_forward.1} parent=87 // loop_exit
                  _
              $region88: #{expert_mlps_forward.1} parent=72 // pred_fallthru
                _
            $region73: #{expert_mlps_forward.1} parent=68 // pred_fallthru
              _
            // Predicated region
            $region74: #{expert_mlps_forward.1} parent=68 // pred_check
              _
            $region75: #{expert_mlps_forward.1} parent=68 // pred_check_branch
              %356 = sbr.rel (0) target = $region77
            $region76: #{expert_mlps_forward.1} parent=68 // pred_region
              loop: start=0, step=1, limit=1
              $region78: #{expert_mlps_forward.1} parent=76 // loop_pre_header
                _
              $region79: #{expert_mlps_forward.1} parent=76 // loop_header
                %s359 = sphi 0, %s363
                %p360 = scmp.ge.s32.totalorder %s359, 1
                %s364 = sphi %s350, %s350
                %s365 = sphi %s346, %s346
              $region80: #{expert_mlps_forward.1} parent=76 // loop_header_branch
                %362 = sbr.rel (%p360) target = $region84
              $region81: #{expert_mlps_forward.1} parent=76 // loop_body
                %v366 = vld [vmem:[%s364] sm:$0xf]
                %367 = vst [vmem:[%s365] sm:$0xf] %v366
                %v368 = vld [vmem:[%s364 + $0x8] sm:$0xf]
                %369 = vst [vmem:[%s365 + $0x4] sm:$0xf] %v368
                %v370 = vld [vmem:[%s364 + $0x10] sm:$0xf]
                %371 = vst [vmem:[%s365 + $0x8] sm:$0xf] %v370
                %v372 = vld [vmem:[%s364 + $0x18] sm:$0xf]
                %373 = vst [vmem:[%s365 + $0xc] sm:$0xf] %v372
                %v374 = vld [vmem:[%s364 + $0x20] sm:$0xf]
                %375 = vst [vmem:[%s365 + $0x10] sm:$0xf] %v374
                %v376 = vld [vmem:[%s364 + $0x28] sm:$0xf]
                %377 = vst [vmem:[%s365 + $0x14] sm:$0xf] %v376
                %v378 = vld [vmem:[%s364 + $0x30] sm:$0xf]
                %379 = vst [vmem:[%s365 + $0x18] sm:$0xf] %v378
                %v380 = vld [vmem:[%s364 + $0x38] sm:$0xf]
                %381 = vst [vmem:[%s365 + $0x1c] sm:$0xf] %v380
                %v382 = vld [vmem:[%s364 + $0x40] sm:$0xf]
                %383 = vst [vmem:[%s365 + $0x20] sm:$0xf] %v382
                %v384 = vld [vmem:[%s364 + $0x48] sm:$0xf]
                %385 = vst [vmem:[%s365 + $0x24] sm:$0xf] %v384
                %v386 = vld [vmem:[%s364 + $0x50] sm:$0xf]
                %387 = vst [vmem:[%s365 + $0x28] sm:$0xf] %v386
                %v388 = vld [vmem:[%s364 + $0x58] sm:$0xf]
                %389 = vst [vmem:[%s365 + $0x2c] sm:$0xf] %v388
                %v390 = vld [vmem:[%s364 + $0x60] sm:$0xf]
                %391 = vst [vmem:[%s365 + $0x30] sm:$0xf] %v390
                %v392 = vld [vmem:[%s364 + $0x68] sm:$0xf]
                %393 = vst [vmem:[%s365 + $0x34] sm:$0xf] %v392
                %v394 = vld [vmem:[%s364 + $0x70] sm:$0xf]
                %395 = vst [vmem:[%s365 + $0x38] sm:$0xf] %v394
                %v396 = vld [vmem:[%s364 + $0x78] sm:$0xf]
                %397 = vst [vmem:[%s365 + $0x3c] sm:$0xf] %v396
              $region82: #{expert_mlps_forward.1} parent=76 // loop_footer
                %s363 = sadd.s32 1, %s359
              $region83: #{expert_mlps_forward.1} parent=76 // loop_footer_branch
                %358 = sbr.rel target = $region79
              $region84: #{expert_mlps_forward.1} parent=76 // loop_exit
                _
            $region77: #{expert_mlps_forward.1} parent=68 // pred_fallthru
              _
          $region69: #{expert_mlps_forward.1} parent=64 // pred_fallthru
            _
          %449 = vnop
        $region65: #{expert_mlps_forward.1} parent=15 // pred_fallthru
          _
        // Predicated region
        $region103: #{expert_mlps_forward.1} parent=15 // pred_check
          %p450 = pneg %p144
        $region104: #{expert_mlps_forward.1} parent=15 // pred_check_branch
          %452 = sbr.rel (%p450) target = $region106
        $region105: #{expert_mlps_forward.1} parent=15 // pred_region
          %s453 = smul.u32 16, %s30
          %p454 = scmp.lt.s32.totalorder %s29, 7
          %s455 = scalar_select %p454, %s29, 7
          %p456 = scmp.lt.s32.totalorder %s453, 31
          %s457 = scalar_select %p456, %s453, 31
          %s458 = smul.addr %s455, 32
          %s459 = sadd.s32 %s457, %s458
          %s460 = smul.addr %s459, 4
          %s461 = scalar_lea.vmem %s4, %s460
          %s462 = smul.u32 16, %s30
        $region106: #{expert_mlps_forward.1} parent=15 // pred_fallthru
          _
        // Predicated region
        $region107: #{expert_mlps_forward.1} parent=15 // pred_check
          %p463 = pneg %p170
        $region108: #{expert_mlps_forward.1} parent=15 // pred_check_branch
          %465 = sbr.rel (%p463) target = $region110
        $region109: #{expert_mlps_forward.1} parent=15 // pred_region
          %s466 = smul.u32 4, %s28
          %p467 = scmp.lt.s32.totalorder %s466, 7
          %s468 = scalar_select %p467, %s466, 7
          %s469 = smul.addr %s468, 8
          %s470 = scalar_lea.vmem %s5, %s469
          %s471 = smul.u32 4, %s28
        $region110: #{expert_mlps_forward.1} parent=15 // pred_fallthru
          _
      $region16: #{expert_mlps_forward.1} parent=5 // pred_fallthru
        _
      %p472 = scmp.le.s32.totalorder 1, %s21
      %p473 = scmp.lt.s32.totalorder %s21, 33
      %p474 = pnand %p472, %p473
      %p475 = pneg %p474
      // Predicated region
      $region111: #{expert_mlps_forward.1} parent=5 // pred_check
        _
      $region112: #{expert_mlps_forward.1} parent=5 // pred_check_branch
        %477 = sbr.rel (%p474) target = $region114
      $region113: #{expert_mlps_forward.1} parent=5 // pred_region
        %s478 = ssub.s32 %s21, 1
        %s479 = sand.u32 %s81, 1
        %s480 = sand.u32 %s81, 1
        %s481 = smul.addr %s480, 64
        %s482 = scalar_lea.vmem [#allocation5], %s481
        // Predicated region
        $region115: #{expert_mlps_forward.1} parent=113 // pred_check
          %p483 = pneg %p94
        $region116: #{expert_mlps_forward.1} parent=113 // pred_check_branch
          %485 = sbr.rel (%p483) target = $region118
        $region117: #{expert_mlps_forward.1} parent=113 // pred_region
          _
        $region118: #{expert_mlps_forward.1} parent=113 // pred_fallthru
          _
        %s486 = sand.u32 %s109, 1
        %s487 = sand.u32 %s109, 1
        %s488 = smul.addr %s487, 64
        %s489 = scalar_lea.vmem [#allocation6], %s488
        // Predicated region
        $region119: #{expert_mlps_forward.1} parent=113 // pred_check
          %p490 = pneg %p122
        $region120: #{expert_mlps_forward.1} parent=113 // pred_check_branch
          %492 = sbr.rel (%p490) target = $region122
        $region121: #{expert_mlps_forward.1} parent=113 // pred_region
          _
        $region122: #{expert_mlps_forward.1} parent=113 // pred_fallthru
          _
        %s493 = smul.u32 4, %s31
        %p494 = scmp.lt.s32.totalorder %s493, 7
        %s495 = scalar_select %p494, %s493, 7
        %s496 = smul.addr %s495, 4
        %s497 = scalar_lea.vmem %s1, %s496
        %p498 = pneg %p66
        %p499 = pneg %p63
        %s500 = sand.u32 %s81, 1
        %s501 = sand.u32 %s81, 1
        %s502 = smul.addr %s501, 64
        %s503 = scalar_lea.vmem [#allocation5], %s502
        %p504 = pneg %p94
        %p505 = pneg %p91
        %s506 = sand.u32 %s109, 1
        %s507 = sand.u32 %s109, 1
        %s508 = smul.addr %s507, 64
        %s509 = scalar_lea.vmem [#allocation6], %s508
        %p510 = pneg %p122
        %p511 = pneg %p119
        %s512 = smul.u32 16, %s33
        %p513 = scmp.lt.s32.totalorder %s32, 7
        %s514 = scalar_select %p513, %s32, 7
        %p515 = scmp.lt.s32.totalorder %s512, 31
        %s516 = scalar_select %p515, %s512, 31
        %s517 = smul.addr %s514, 32
        %s518 = sadd.s32 %s516, %s517
        %s519 = smul.addr %s518, 4
        %s520 = scalar_lea.vmem %s4, %s519
        %p521 = pneg %p150
        %p522 = pneg %p147
        %s523 = smul.u32 4, %s31
        %p524 = scmp.lt.s32.totalorder %s523, 7
        %s525 = scalar_select %p524, %s523, 7
        %s526 = smul.addr %s525, 8
        %s527 = scalar_lea.vmem %s5, %s526
        %p528 = pneg %p176
        %p529 = pneg %p173
        %p530 = pneg %p202
        %p531 = pneg %p199
        %s532 = sand.u32 %s189, 1
        %s533 = scalar_lea.sflag [#allocation8], %s532
        %s534 = sand.u32 %s189, 1
        %s535 = smul.addr %s534, 32
        %s536 = scalar_lea.vmem [#allocation7], %s535
        %s537 = smul.u32 4, %s31
        %p538 = scmp.lt.s32.totalorder %s537, 7
        %s539 = scalar_select %p538, %s537, 7
        %s540 = smul.addr %s539, 4
        %s541 = scalar_lea.vmem %s1, %s540
        %s542 = smul.u32 4, %s31
        %s543 = smul.u32 16, %s33
        %p544 = scmp.lt.s32.totalorder %s32, 7
        %s545 = scalar_select %p544, %s32, 7
        %p546 = scmp.lt.s32.totalorder %s543, 31
        %s547 = scalar_select %p546, %s543, 31
        %s548 = smul.addr %s545, 32
        %s549 = sadd.s32 %s547, %s548
        %s550 = smul.addr %s549, 4
        %s551 = scalar_lea.vmem %s4, %s550
        %s552 = smul.u32 16, %s33
        %s553 = smul.u32 4, %s31
        %p554 = scmp.lt.s32.totalorder %s553, 7
        %s555 = scalar_select %p554, %s553, 7
        %s556 = smul.addr %s555, 8
        %s557 = scalar_lea.vmem %s5, %s556
        %s558 = smul.u32 4, %s31
        %s559 = smul.u32 4, %s31
        %p561 = scmp.eq.s32.totalorder %s32, 0
        %p562 = scmp.eq.s32.totalorder %s33, 0
        %p563 = pnand %p561, %p562
        %p564 = pneg %p563
        // Predicated region
        $region123: #{expert_mlps_forward.1} parent=113 // pred_check
          _
        $region124: #{expert_mlps_forward.1} parent=113 // pred_check_branch
          %566 = sbr.rel (%p563) target = $region126
        $region125: #{expert_mlps_forward.1} parent=113 // pred_region
          %567 = vst [vmem:[#allocation2] sm:$0xff] 0.0
          %568 = vst [vmem:[#allocation2 + $0x8] sm:$0xff] 0.0
          %569 = vst [vmem:[#allocation2 + $0x10] sm:$0xff] 0.0
          %570 = vst [vmem:[#allocation2 + $0x18] sm:$0xff] 0.0
        $region126: #{expert_mlps_forward.1} parent=113 // pred_fallthru
          _
        %s571 = sshra.s32 %s32, 7
        %s572 = sand.u32 %s32, 127
        %s573 = sadd.s32 %s571, %s31
        %s574 = smul.u32 %s573, 128
        %s575 = sshra.s32 %s32, 7
        %s576 = sand.u32 %s32, 127
        %s577 = sadd.s32 %s574, %s576
        %s578 = sld [smem:[#allocation4 + %s577]]
        %p579 = scmp.ne.s32.totalorder %s578, 0
        // Predicated region
        $region127: #{expert_mlps_forward.1} parent=113 // pred_check
          %p580 = pneg %p579
        $region128: #{expert_mlps_forward.1} parent=113 // pred_check_branch
          %582 = sbr.rel (%p580) target = $region130
        $region129: #{expert_mlps_forward.1} parent=113 // pred_region
          %v583 = vld [vmem:[%s541] sm:$0xf]
          %v584 = vld [vmem:[%s541 + $0x4] sm:$0xf]
          %v585 = vld [vmem:[%s541 + $0x8] sm:$0xf]
          %v586 = vld [vmem:[%s541 + $0xc] sm:$0xf]
          %v587 = vld [vmem:[%s482] sm:$0xf]
          %v588 = vld [vmem:[%s482 + $0x4] sm:$0xf]
          %v589 = vld [vmem:[%s482 + $0x8] sm:$0xf]
          %v590 = vld [vmem:[%s482 + $0xc] sm:$0xf]
          %v591 = vld [vmem:[%s482 + $0x10] sm:$0xf]
          %v592 = vld [vmem:[%s482 + $0x14] sm:$0xf]
          %v593 = vld [vmem:[%s482 + $0x18] sm:$0xf]
          %v594 = vld [vmem:[%s482 + $0x1c] sm:$0xf]
          %v595 = vld [vmem:[%s482 + $0x20] sm:$0xf]
          %v596 = vld [vmem:[%s482 + $0x24] sm:$0xf]
          %v597 = vld [vmem:[%s482 + $0x28] sm:$0xf]
          %v598 = vld [vmem:[%s482 + $0x2c] sm:$0xf]
          %v599 = vld [vmem:[%s482 + $0x30] sm:$0xf]
          %v600 = vld [vmem:[%s482 + $0x34] sm:$0xf]
          %v601 = vld [vmem:[%s482 + $0x38] sm:$0xf]
          %v602 = vld [vmem:[%s482 + $0x3c] sm:$0xf]
          %v607 = vunpack.c.l.b16 %v583
          %v608 = vunpack.c.l.b16 %v584
          %v609 = vunpack.c.l.b16 %v585
          %v610 = vunpack.c.l.b16 %v586
          %v611 = vpack.c.b16 %v608, %v607
          %v612 = vpack.c.b16 %v610, %v609
          %v631 = vunpack.c.l.b16 %v587
          %v632 = vunpack.c.l.b16 %v588
          %v633 = vunpack.c.l.b16 %v589
          %v634 = vunpack.c.l.b16 %v590
          %v635 = vunpack.c.l.b16 %v591
          %v636 = vunpack.c.l.b16 %v592
          %v637 = vunpack.c.l.b16 %v593
          %v638 = vunpack.c.l.b16 %v594
          %v639 = vunpack.c.l.b16 %v595
          %v640 = vunpack.c.l.b16 %v596
          %v641 = vunpack.c.l.b16 %v597
          %v642 = vunpack.c.l.b16 %v598
          %v643 = vunpack.c.l.b16 %v599
          %v644 = vunpack.c.l.b16 %v600
          %v645 = vunpack.c.l.b16 %v601
          %v646 = vunpack.c.l.b16 %v602
          %v647 = vpack.c.b16 %v632, %v631
          %v648 = vpack.c.b16 %v634, %v633
          %v649 = vpack.c.b16 %v636, %v635
          %v650 = vpack.c.b16 %v638, %v637
          %v651 = vpack.c.b16 %v640, %v639
          %v652 = vpack.c.b16 %v642, %v641
          %v653 = vpack.c.b16 %v644, %v643
          %v654 = vpack.c.b16 %v646, %v645
          %663 = vmatprep.subr.bf16.mxu0 0
          %664 = vmatpush1.bf16.msra.mxu0 %v647
          %665 = vmatprep.subr.bf16.mxu0 0
          %666 = vmatpush1.bf16.msra.mxu0 %v648
          %667 = vmatprep.subr.bf16.mxu0 0
          %668 = vmatpush1.bf16.msra.mxu0 %v649
          %669 = vmatprep.subr.bf16.mxu0 0
          %670 = vmatpush1.bf16.msra.mxu0 %v650
          %671 = vmatprep.subr.bf16.mxu0 0
          %672 = vmatpush1.bf16.msra.mxu0 %v651
          %673 = vmatprep.subr.bf16.mxu0 0
          %674 = vmatpush1.bf16.msra.mxu0 %v652
          %675 = vmatprep.subr.bf16.mxu0 0
          %676 = vmatpush1.bf16.msra.mxu0 %v653
          %677 = vmatprep.subr.bf16.mxu0 0
          %678 = vmatpush1.bf16.msra.mxu0 %v654
          %679 = vmatprep.subr.bf16.mxu0 0
          %680 = vmatpush1.bf16.msra.mxu0 0
          %681 = vmatprep.subr.bf16.mxu0 0
          %682 = vmatpush1.bf16.msra.mxu0 0
          %683 = vmatprep.subr.bf16.mxu0 0
          %684 = vmatpush1.bf16.msra.mxu0 0
          %685 = vmatprep.subr.bf16.mxu0 0
          %686 = vmatpush1.bf16.msra.mxu0 0
          %687 = vmatprep.subr.bf16.mxu0 0
          %688 = vmatpush1.bf16.msra.mxu0 0
          %689 = vmatprep.subr.bf16.mxu0 0
          %690 = vmatpush1.bf16.msra.mxu0 0
          %691 = vmatprep.subr.bf16.mxu0 0
          %692 = vmatpush1.bf16.msra.mxu0 0
          %693 = vmatprep.subr.bf16.mxu0 0
          %694 = vmatpush1.bf16.msra.mxu0 0
          %695 = vmatprep.mubr.bf16.mxu0 0
          %696 = vmatmul.mubr.bf16.gmra.mrb[0].mxu0 %v611
          %v697 = vpop.f32.mrb[0].mxu0
          %v698 = vadd.f32 0.0, %v697
          %v699 = vpop.f32.mrb[0].mxu0
          %v700 = vpop.f32.mrb[0].mxu0
          %v701 = vadd.f32 0.0, %v700
          %v702 = vpop.f32.mrb[0].mxu0
          %703 = vmatprep.mubr.bf16.mxu0 0
          %704 = vmatmul.mubr.bf16.gmra.mrb[0].mxu0 %v612
          %v705 = vpop.f32.mrb[0].mxu0
          %v706 = vadd.f32 0.0, %v705
          %v707 = vpop.f32.mrb[0].mxu0
          %v708 = vpop.f32.mrb[0].mxu0
          %v709 = vadd.f32 0.0, %v708
          %v710 = vpop.f32.mrb[0].mxu0
          %711 = vdwg.mxu0
          %v712 = vld [vmem:[%s489] sm:$0xf]
          %v713 = vld [vmem:[%s489 + $0x4] sm:$0xf]
          %v714 = vld [vmem:[%s489 + $0x8] sm:$0xf]
          %v715 = vld [vmem:[%s489 + $0xc] sm:$0xf]
          %v716 = vld [vmem:[%s489 + $0x10] sm:$0xf]
          %v717 = vld [vmem:[%s489 + $0x14] sm:$0xf]
          %v718 = vld [vmem:[%s489 + $0x18] sm:$0xf]
          %v719 = vld [vmem:[%s489 + $0x1c] sm:$0xf]
          %v720 = vld [vmem:[%s489 + $0x20] sm:$0xf]
          %v721 = vld [vmem:[%s489 + $0x24] sm:$0xf]
          %v722 = vld [vmem:[%s489 + $0x28] sm:$0xf]
          %v723 = vld [vmem:[%s489 + $0x2c] sm:$0xf]
          %v724 = vld [vmem:[%s489 + $0x30] sm:$0xf]
          %v725 = vld [vmem:[%s489 + $0x34] sm:$0xf]
          %v726 = vld [vmem:[%s489 + $0x38] sm:$0xf]
          %v727 = vld [vmem:[%s489 + $0x3c] sm:$0xf]
          %v744 = vunpack.c.l.b16 %v712
          %v745 = vunpack.c.l.b16 %v713
          %v746 = vunpack.c.l.b16 %v714
          %v747 = vunpack.c.l.b16 %v715
          %v748 = vunpack.c.l.b16 %v716
          %v749 = vunpack.c.l.b16 %v717
          %v750 = vunpack.c.l.b16 %v718
          %v751 = vunpack.c.l.b16 %v719
          %v752 = vunpack.c.l.b16 %v720
          %v753 = vunpack.c.l.b16 %v721
          %v754 = vunpack.c.l.b16 %v722
          %v755 = vunpack.c.l.b16 %v723
          %v756 = vunpack.c.l.b16 %v724
          %v757 = vunpack.c.l.b16 %v725
          %v758 = vunpack.c.l.b16 %v726
          %v759 = vunpack.c.l.b16 %v727
          %v760 = vpack.c.b16 %v745, %v744
          %v761 = vpack.c.b16 %v747, %v746
          %v762 = vpack.c.b16 %v749, %v748
          %v763 = vpack.c.b16 %v751, %v750
          %v764 = vpack.c.b16 %v753, %v752
          %v765 = vpack.c.b16 %v755, %v754
          %v766 = vpack.c.b16 %v757, %v756
          %v767 = vpack.c.b16 %v759, %v758
          %776 = vmatprep.subr.bf16.mxu0 0
          %777 = vmatpush1.bf16.msra.mxu0 %v760
          %778 = vmatprep.subr.bf16.mxu0 0
          %779 = vmatpush1.bf16.msra.mxu0 %v761
          %780 = vmatprep.subr.bf16.mxu0 0
          %781 = vmatpush1.bf16.msra.mxu0 %v762
          %782 = vmatprep.subr.bf16.mxu0 0
          %783 = vmatpush1.bf16.msra.mxu0 %v763
          %784 = vmatprep.subr.bf16.mxu0 0
          %785 = vmatpush1.bf16.msra.mxu0 %v764
          %786 = vmatprep.subr.bf16.mxu0 0
          %787 = vmatpush1.bf16.msra.mxu0 %v765
          %788 = vmatprep.subr.bf16.mxu0 0
          %789 = vmatpush1.bf16.msra.mxu0 %v766
          %790 = vmatprep.subr.bf16.mxu0 0
          %791 = vmatpush1.bf16.msra.mxu0 %v767
          %792 = vmatprep.subr.bf16.mxu0 0
          %793 = vmatpush1.bf16.msra.mxu0 0
          %794 = vmatprep.subr.bf16.mxu0 0
          %795 = vmatpush1.bf16.msra.mxu0 0
          %796 = vmatprep.subr.bf16.mxu0 0
          %797 = vmatpush1.bf16.msra.mxu0 0
          %798 = vmatprep.subr.bf16.mxu0 0
          %799 = vmatpush1.bf16.msra.mxu0 0
          %800 = vmatprep.subr.bf16.mxu0 0
          %801 = vmatpush1.bf16.msra.mxu0 0
          %802 = vmatprep.subr.bf16.mxu0 0
          %803 = vmatpush1.bf16.msra.mxu0 0
          %804 = vmatprep.subr.bf16.mxu0 0
          %805 = vmatpush1.bf16.msra.mxu0 0
          %806 = vmatprep.subr.bf16.mxu0 0
          %807 = vmatpush1.bf16.msra.mxu0 0
          %808 = vmatprep.mubr.bf16.mxu0 0
          %809 = vmatmul.mubr.bf16.gmra.mrb[0].mxu0 %v611
          %v810 = vpop.f32.mrb[0].mxu0
          %v811 = vadd.f32 0.0, %v810
          %v812 = vpop.f32.mrb[0].mxu0
          %v813 = vpop.f32.mrb[0].mxu0
          %v814 = vadd.f32 0.0, %v813
          %v815 = vpop.f32.mrb[0].mxu0
          %816 = vmatprep.mubr.bf16.mxu0 0
          %817 = vmatmul.mubr.bf16.gmra.mrb[0].mxu0 %v612
          %v818 = vpop.f32.mrb[0].mxu0
          %v819 = vadd.f32 0.0, %v818
          %v820 = vpop.f32.mrb[0].mxu0
          %v821 = vpop.f32.mrb[0].mxu0
          %v822 = vadd.f32 0.0, %v821
          %v823 = vpop.f32.mrb[0].mxu0
          %824 = vdwg.mxu0
          %v825 = vxor.u32 %v698, 2147483648
          %v826 = vxor.u32 %v701, 2147483648
          %v827 = vxor.u32 %v706, 2147483648
          %v828 = vxor.u32 %v709, 2147483648
          %v829 = vmul.f32 %v825, 1.442695
          %v830 = vpow.pop %v829
          %v831 = vmul.f32 %v826, 1.442695
          %v832 = vpow.pop %v831
          %v833 = vmul.f32 %v827, 1.442695
          %v834 = vpow.pop %v833
          %v835 = vmul.f32 %v828, 1.442695
          %v836 = vpow.pop %v835
          %v837 = vadd.f32 %v830, 1.0
          %v838 = vadd.f32 %v832, 1.0
          %v839 = vadd.f32 %v834, 1.0
          %v840 = vadd.f32 %v836, 1.0
          %v841 = vrcp.pop %v837
          %v842 = vmul.f32 1.0, %v841
          %v843 = vrcp.pop %v838
          %v844 = vmul.f32 1.0, %v843
          %v845 = vrcp.pop %v839
          %v846 = vmul.f32 1.0, %v845
          %v847 = vrcp.pop %v840
          %v848 = vmul.f32 1.0, %v847
          %v849 = vmul.f32 %v698, %v842
          %v850 = vmul.f32 %v701, %v844
          %v851 = vmul.f32 %v706, %v846
          %v852 = vmul.f32 %v709, %v848
          %v853 = vmul.f32 %v849, %v811
          %v854 = vmul.f32 %v850, %v814
          %v855 = vmul.f32 %v851, %v819
          %v856 = vmul.f32 %v852, %v822
          %v857 = vpack.c.bf16 %v854, %v853
          %v858 = vpack.c.bf16 %v856, %v855
          %v859 = vld [vmem:[%s551] sm:$0xf]
          %v860 = vld [vmem:[%s551 + $0x4] sm:$0xf]
          %v861 = vld [vmem:[%s551 + $0x8] sm:$0xf]
          %v862 = vld [vmem:[%s551 + $0xc] sm:$0xf]
          %v863 = vld [vmem:[%s551 + $0x10] sm:$0xf]
          %v864 = vld [vmem:[%s551 + $0x14] sm:$0xf]
          %v865 = vld [vmem:[%s551 + $0x18] sm:$0xf]
          %v866 = vld [vmem:[%s551 + $0x1c] sm:$0xf]
          %v867 = vld [vmem:[%s551 + $0x20] sm:$0xf]
          %v868 = vld [vmem:[%s551 + $0x24] sm:$0xf]
          %v869 = vld [vmem:[%s551 + $0x28] sm:$0xf]
          %v870 = vld [vmem:[%s551 + $0x2c] sm:$0xf]
          %v871 = vld [vmem:[%s551 + $0x30] sm:$0xf]
          %v872 = vld [vmem:[%s551 + $0x34] sm:$0xf]
          %v873 = vld [vmem:[%s551 + $0x38] sm:$0xf]
          %v874 = vld [vmem:[%s551 + $0x3c] sm:$0xf]
          %v891 = vunpack.c.l.b16 %v859
          %v892 = vunpack.c.l.b16 %v860
          %v893 = vunpack.c.l.b16 %v861
          %v894 = vunpack.c.l.b16 %v862
          %v895 = vunpack.c.l.b16 %v863
          %v896 = vunpack.c.l.b16 %v864
          %v897 = vunpack.c.l.b16 %v865
          %v898 = vunpack.c.l.b16 %v866
          %v899 = vunpack.c.l.b16 %v867
          %v900 = vunpack.c.l.b16 %v868
          %v901 = vunpack.c.l.b16 %v869
          %v902 = vunpack.c.l.b16 %v870
          %v903 = vunpack.c.l.b16 %v871
          %v904 = vunpack.c.l.b16 %v872
          %v905 = vunpack.c.l.b16 %v873
          %v906 = vunpack.c.l.b16 %v874
          %v907 = vpack.c.b16 %v892, %v891
          %v908 = vpack.c.b16 %v894, %v893
          %v909 = vpack.c.b16 %v896, %v895
          %v910 = vpack.c.b16 %v898, %v897
          %v911 = vpack.c.b16 %v900, %v899
          %v912 = vpack.c.b16 %v902, %v901
          %v913 = vpack.c.b16 %v904, %v903
          %v914 = vpack.c.b16 %v906, %v905
          %923 = vmatprep.subr.bf16.mxu0 0
          %924 = vmatpush1.bf16.msra.mxu0 %v907
          %925 = vmatprep.subr.bf16.mxu0 0
          %926 = vmatpush1.bf16.msra.mxu0 %v908
          %927 = vmatprep.subr.bf16.mxu0 0
          %928 = vmatpush1.bf16.msra.mxu0 %v909
          %929 = vmatprep.subr.bf16.mxu0 0
          %930 = vmatpush1.bf16.msra.mxu0 %v910
          %931 = vmatprep.subr.bf16.mxu0 0
          %932 = vmatpush1.bf16.msra.mxu0 %v911
          %933 = vmatprep.subr.bf16.mxu0 0
          %934 = vmatpush1.bf16.msra.mxu0 %v912
          %935 = vmatprep.subr.bf16.mxu0 0
          %936 = vmatpush1.bf16.msra.mxu0 %v913
          %937 = vmatprep.subr.bf16.mxu0 0
          %938 = vmatpush1.bf16.msra.mxu0 %v914
          %939 = vmatprep.subr.bf16.mxu0 0
          %940 = vmatpush1.bf16.msra.mxu0 0
          %941 = vmatprep.subr.bf16.mxu0 0
          %942 = vmatpush1.bf16.msra.mxu0 0
          %943 = vmatprep.subr.bf16.mxu0 0
          %944 = vmatpush1.bf16.msra.mxu0 0
          %945 = vmatprep.subr.bf16.mxu0 0
          %946 = vmatpush1.bf16.msra.mxu0 0
          %947 = vmatprep.subr.bf16.mxu0 0
          %948 = vmatpush1.bf16.msra.mxu0 0
          %949 = vmatprep.subr.bf16.mxu0 0
          %950 = vmatpush1.bf16.msra.mxu0 0
          %951 = vmatprep.subr.bf16.mxu0 0
          %952 = vmatpush1.bf16.msra.mxu0 0
          %953 = vmatprep.subr.bf16.mxu0 0
          %954 = vmatpush1.bf16.msra.mxu0 0
          %955 = vmatprep.mubr.bf16.mxu0 0
          %956 = vmatmul.mubr.bf16.gmra.mrb[0].mxu0 %v857
          %v957 = vpop.f32.mrb[0].mxu0
          %v958 = vadd.f32 0.0, %v957
          %v959 = vpop.f32.mrb[0].mxu0
          %v960 = vpop.f32.mrb[0].mxu0
          %v961 = vadd.f32 0.0, %v960
          %v962 = vpop.f32.mrb[0].mxu0
          %963 = vmatprep.mubr.bf16.mxu0 0
          %964 = vmatmul.mubr.bf16.gmra.mrb[0].mxu0 %v858
          %v965 = vpop.f32.mrb[0].mxu0
          %v966 = vadd.f32 0.0, %v965
          %v967 = vpop.f32.mrb[0].mxu0
          %v968 = vpop.f32.mrb[0].mxu0
          %v969 = vadd.f32 0.0, %v968
          %v970 = vpop.f32.mrb[0].mxu0
          %971 = vdwg.mxu0
          %v972 = vld [vmem:[%s557] sm:$0xff]
          %v973 = vld [vmem:[%s557 + $0x8] sm:$0xff]
          %v974 = vld [vmem:[%s557 + $0x10] sm:$0xff]
          %v975 = vld [vmem:[%s557 + $0x18] sm:$0xff]
          %v976 = vlaneseq
          %v977 = vand.u32 %v976, 127
          %v978 = vstv %s32
          %vm979 = vcmp.eq.s32.totalorder %v977, %v978
          %v980 = vsel %vm979, %v972, 0.0
          %v981 = vsel %vm979, %v973, 0.0
          %v982 = vsel %vm979, %v974, 0.0
          %v983 = vsel %vm979, %v975, 0.0
          %984 = vadd.xlane.f32.xlu0 %v980
          %v985 = vpop.xlane.xlu0 %984
          %986 = vadd.xlane.f32.xlu0 %v981
          %v987 = vpop.xlane.xlu0 %986
          %988 = vadd.xlane.f32.xlu0 %v982
          %v989 = vpop.xlane.xlu0 %988
          %990 = vadd.xlane.f32.xlu0 %v983
          %v991 = vpop.xlane.xlu0 %990
          %v992 = vld [vmem:[#allocation2] sm:$0xff]
          %v993 = vld [vmem:[#allocation2 + $0x8] sm:$0xff]
          %v994 = vld [vmem:[#allocation2 + $0x10] sm:$0xff]
          %v995 = vld [vmem:[#allocation2 + $0x18] sm:$0xff]
          %v996 = vmul.f32 %v985, %v958
          %v997 = vmul.f32 %v987, %v961
          %v998 = vmul.f32 %v989, %v966
          %v999 = vmul.f32 %v991, %v969
          %v1000 = vadd.f32 %v992, %v996
          %v1001 = vadd.f32 %v993, %v997
          %v1002 = vadd.f32 %v994, %v998
          %v1003 = vadd.f32 %v995, %v999
          %1004 = vst [vmem:[#allocation2] sm:$0xff] %v1000
          %1005 = vst [vmem:[#allocation2 + $0x8] sm:$0xff] %v1001
          %1006 = vst [vmem:[#allocation2 + $0x10] sm:$0xff] %v1002
          %1007 = vst [vmem:[#allocation2 + $0x18] sm:$0xff] %v1003
        $region130: #{expert_mlps_forward.1} parent=113 // pred_fallthru
          _
        %p1008 = scmp.eq.s32.totalorder %s32, 7
        %p1009 = scmp.eq.s32.totalorder %s33, 1
        %p1010 = pnand %p1008, %p1009
        %p1011 = pneg %p1010
        // Predicated region
        $region131: #{expert_mlps_forward.1} parent=113 // pred_check
          _
        $region132: #{expert_mlps_forward.1} parent=113 // pred_check_branch
          %1013 = sbr.rel (%p1010) target = $region134
        $region133: #{expert_mlps_forward.1} parent=113 // pred_region
          %v1014 = vld [vmem:[#allocation2] sm:$0xff]
          %v1015 = vld [vmem:[#allocation2 + $0x8] sm:$0xff]
          %v1016 = vld [vmem:[#allocation2 + $0x10] sm:$0xff]
          %v1017 = vld [vmem:[#allocation2 + $0x18] sm:$0xff]
          %1018 = vst [vmem:[%s536] sm:$0xff] %v1014
          %1019 = vst [vmem:[%s536 + $0x8] sm:$0xff] %v1015
          %1020 = vst [vmem:[%s536 + $0x10] sm:$0xff] %v1016
          %1021 = vst [vmem:[%s536 + $0x18] sm:$0xff] %v1017
        $region134: #{expert_mlps_forward.1} parent=113 // pred_fallthru
          _
        %s1022 = sand.u32 %s189, 1
        %s1023 = scalar_lea.sflag [#allocation8], %s1022
        %s1024 = sand.u32 %s189, 1
        %s1025 = smul.addr %s1024, 32
        %s1026 = scalar_lea.vmem [#allocation7], %s1025
        // Predicated region
        $region135: #{expert_mlps_forward.1} parent=113 // pred_check
          %p1027 = pneg %p199
        $region136: #{expert_mlps_forward.1} parent=113 // pred_check_branch
          %1029 = sbr.rel (%p1027) target = $region138
        $region137: #{expert_mlps_forward.1} parent=113 // pred_region
          %s1030 = smul.u32 4, %s31
          %s1032 = ssub.s32 512, 512
          %1033 = vsyncadd %s1023, %s1032
          %s1034 = smul.addr %s1030, 128
          %s1035 = scalar_lea.hbm %s6, %s1034
          %s1036 = sshll.u32 %s1026, 4
          %s1037 = int_to_ptr.vmem [resolvable:$true] %s1036
          %1042 = dma.vmem_to_hbm [thread:$0]  %s1037, 512, %s1035, %s1023, 128, 128, 8
        $region138: #{expert_mlps_forward.1} parent=113 // pred_fallthru
          _
      $region114: #{expert_mlps_forward.1} parent=5 // pred_fallthru
        _
      %p1043 = scmp.le.s32.totalorder 2, %s21
      // Predicated region
      $region139: #{expert_mlps_forward.1} parent=5 // pred_check
        %p1044 = pneg %p1043
      $region140: #{expert_mlps_forward.1} parent=5 // pred_check_branch
        %1046 = sbr.rel (%p1044) target = $region142
      $region141: #{expert_mlps_forward.1} parent=5 // pred_region
        %s1047 = ssub.s32 %s21, 2
        // Predicated region
        $region143: #{expert_mlps_forward.1} parent=141 // pred_check
          %p1048 = pneg %p205
        $region144: #{expert_mlps_forward.1} parent=141 // pred_check_branch
          %1050 = sbr.rel (%p1048) target = $region146
        $region145: #{expert_mlps_forward.1} parent=141 // pred_region
          %s1051 = sand.u32 %s190, 1
          %s1052 = scalar_lea.sflag [#allocation8], %s1051
          %s1053 = sand.u32 %s190, 1
          %s1054 = smul.addr %s1053, 32
          %s1055 = scalar_lea.vmem [#allocation7], %s1054
          %1056 = dma.done %s1052, 512
        $region146: #{expert_mlps_forward.1} parent=141 // pred_fallthru
          _
      $region142: #{expert_mlps_forward.1} parent=5 // pred_fallthru
        _
    $region6: #{expert_mlps_forward.1} parent=1 // loop_footer
      %s25 = sadd.s32 1, %s21
    $region7: #{expert_mlps_forward.1} parent=1 // loop_footer_branch
      %20 = sbr.rel target = $region3
    $region8: #{expert_mlps_forward.1} parent=1 // loop_exit
      _
    %1057 = vsyncpa [#allocation8], 1
    %s1058 = scalar_lea.sflag [#allocation8], 1
    %1059 = vsyncpa %s1058, 1

</llo_original>
